<compile_context>
chip_gen: v5e
topology: v5e:2x2
jax: 0.10.0
libtpu: 0.0.40
codegen_flags: <defaults>
</compile_context>

<pallas_src>
import jax
import jax.numpy as jnp
from jax.experimental import pallas as pl
from jax.experimental.pallas import tpu as pltpu


def ma_kernel(valid_ref, match_ref, hu_ref,
              wih_ref, whh_ref, brz_ref, bhn_ref,
              w12_ref, b1_ref, ts_ref, wo_ref, bo_ref,
              g_ref):
    """Whole forward pass in one kernel (tiny shapes, everything fits VMEM).

    Row layout of 2D operands is time-major: row r <-> (t = r // B, b = r % B).
    Matmul operands are bf16, accumulation and elementwise math are f32.
    """
    TB = match_ref.shape[0]
    B = g_ref.shape[0]
    T = TB // B
    H = whh_ref.shape[0]

    # ---- hoisted input projection (b_ih + r/z part of b_hh folded in) ----
    gi = jnp.dot(match_ref[...], wih_ref[...],
                 preferred_element_type=jnp.float32) + brz_ref[...]      # (TB, 3H) f32

    whh = whh_ref[...]                                                   # (H, 3H) bf16
    bhn = bhn_ref[...]                                                   # (1, H)  f32
    valid = valid_ref[...]                                               # (TB, 1) f32

    # ---- GRU recurrence over T (static unroll; only the fused h-dot is serial) --
    # Per-step hidden state lives in vregs; no VMEM scratch stores on the chain.
    h = jnp.zeros((B, H), jnp.float32)
    outs = []
    for t in range(T):
        lo = t * B
        gh = jnp.dot(h.astype(jnp.bfloat16), whh,
                     preferred_element_type=jnp.float32)                 # (B, 3H) f32
        gi_t = gi[lo:lo + B, :]
        r = jax.nn.sigmoid(gi_t[:, :H] + gh[:, :H])
        z = jax.nn.sigmoid(gi_t[:, H:2 * H] + gh[:, H:2 * H])
        n = jnp.tanh(gi_t[:, 2 * H:] + r * (gh[:, 2 * H:] + bhn))
        h = n + z * (h - n)                          # == (1 - z) * n + z * h
        # Length masking is NOT on the serial chain: padding is strictly trailing,
        # so unmasked h never reaches a valid output; only the emitted copy is
        # zeroed (off the critical path).
        outs.append(h * valid[lo:lo + B, :])

    out = jnp.concatenate(outs, axis=0)                                  # (TB, H) f32

    # ---- dynamic fusion: ONE stacked matmul over concat([h_u, out], features) ----
    feat = jnp.concatenate([hu_ref[...], out.astype(jnp.bfloat16)], axis=1)  # (TB, Hs+H) bf16
    tt = jnp.tanh(jnp.dot(feat, w12_ref[...],
                          preferred_element_type=jnp.float32) + b1_ref[...])  # (TB, q) f32
    scores = jnp.dot(tt.astype(jnp.bfloat16), ts_ref[...],
                     preferred_element_type=jnp.float32)                 # (TB, 1) f32

    # ---- per-batch-row softmax over the time axis, laid out as (B, T) ----
    # (padded timesteps stay in the softmax, matching the PyTorch module; their
    #  linear2(out) contribution is zero because out is masked.)
    scores_bt = jnp.concatenate([scores[t * B:(t + 1) * B, :] for t in range(T)],
                                axis=1)                                  # (B, T) f32
    m = jnp.max(scores_bt, axis=-1, keepdims=True)                       # (B, 1)
    e = jnp.exp(scores_bt - m)                                           # (B, T)
    denom = jnp.sum(e, axis=-1, keepdims=True)                           # (B, 1)
    alpha = e * pl.reciprocal(denom, approx=True)                        # (B, T)

    # ---- L[b, :] = sum_t alpha[b, t] * out[t*B+b, :]  (per-row weighted sum) ----
    L = jnp.zeros((B, H), jnp.float32)
    for t in range(T):
        L = L + alpha[:, t:t + 1] * outs[t]

    g_ref[...] = jnp.dot(L.astype(jnp.bfloat16), wo_ref[...],
                         preferred_element_type=jnp.float32) + bo_ref[...]


def matching_accumulation(num_utterance, match, h_u, params):
    B, T, I = match.shape
    Hs = h_u.shape[-1]
    H = params['whh_T'].shape[0]
    bf16 = jnp.bfloat16

    # ---- layout plumbing: time-major flattened 2D operands, bf16 matmul inputs ----
    match_t = jnp.transpose(match, (1, 0, 2)).reshape(T * B, I).astype(bf16)
    hu_t = jnp.transpose(h_u, (1, 0, 2)).reshape(T * B, Hs).astype(bf16)

    # Length mask (pure function of num_utterance) built here, not in the kernel.
    lens = num_utterance.astype(jnp.int32).reshape(1, B)
    t_idx = jnp.arange(T, dtype=jnp.int32).reshape(T, 1)
    valid = (t_idx < lens).astype(jnp.float32).reshape(T * B, 1)

    # Fold b_ih (all gates) + b_hh (r, z gates) into the hoisted input projection;
    # b_hn must stay separate (it sits under r * (...)).
    brz = params['b_ih'] + jnp.concatenate(
        [params['b_hh'][:, :2 * H], jnp.zeros((1, H), jnp.float32)], axis=1)
    bhn = params['b_hh'][:, 2 * H:]

    # Stacked fusion weight: single K = Hs + H matmul instead of two.
    w12 = jnp.concatenate([params['w1_T'], params['w2_T']], axis=0)      # (Hs+H, q)

    args = (valid, match_t, hu_t,
            params['wih_T'].astype(bf16), params['whh_T'].astype(bf16),
            brz, bhn,
            w12.astype(bf16), params['b1'], params['ts'].astype(bf16),
            params['wo_T'].astype(bf16), params['bo'])

    return pl.pallas_call(
        ma_kernel,
        out_shape=jax.ShapeDtypeStruct((B, 2), jnp.float32),
        in_specs=[pl.BlockSpec(memory_space=pltpu.MemorySpace.VMEM)] * len(args),
        out_specs=pl.BlockSpec(memory_space=pltpu.MemorySpace.VMEM),
    )(*args)


def reference(num_utterance, match, h_u, params):
    """Pure-JAX f32 reference mirroring the PyTorch forward (dynamic fusion)."""
    B, T, _ = match.shape
    H = params['whh_T'].shape[0]
    lens = num_utterance.astype(jnp.float32).reshape(B, 1)
    h = jnp.zeros((B, H), jnp.float32)
    outs = []
    for t in range(T):
        x_t = match[:, t, :]
        gi = x_t @ params['wih_T'] + params['b_ih']
        gh = h @ params['whh_T'] + params['b_hh']
        r = jax.nn.sigmoid(gi[:, :H] + gh[:, :H])
        z = jax.nn.sigmoid(gi[:, H:2 * H] + gh[:, H:2 * H])
        n = jnp.tanh(gi[:, 2 * H:] + r * gh[:, 2 * H:])
        h_new = (1.0 - z) * n + z * h
        valid = jnp.float32(t) < lens
        h = jnp.where(valid, h_new, h)
        outs.append(jnp.where(valid, h_new, 0.0))
    out = jnp.stack(outs, axis=1)                                        # (B, T, H)
    tt = jnp.tanh(jnp.einsum('btd,dq->btq', h_u, params['w1_T']) + params['b1']
                  + jnp.einsum('bth,hq->btq', out, params['w2_T']))
    scores = jnp.einsum('btq,qo->bto', tt, params['ts'])[..., 0]         # (B, T)
    alpha = jax.nn.softmax(scores, axis=-1)
    L = jnp.sum(alpha[:, :, None] * out, axis=1)
    return L @ params['wo_T'] + params['bo']


def init_params(key, inter_size, hidden_size_ma, hidden_size, q):
    H, Hs, I = hidden_size_ma, hidden_size, inter_size
    ks = jax.random.split(key, 10)
    ortho = jax.nn.initializers.orthogonal()
    xavier = jax.nn.initializers.glorot_uniform()
    bnd = 1.0 / jnp.sqrt(H)
    params = {
        # GRU (PyTorch layout: (3H, in)) -> stored transposed for x @ W
        'wih_T': ortho(ks[0], (3 * H, I), jnp.float32).T,
        'whh_T': ortho(ks[1], (3 * H, H), jnp.float32).T,
        'b_ih': jax.random.uniform(ks[2], (1, 3 * H), jnp.float32, -bnd, bnd),
        'b_hh': jax.random.uniform(ks[3], (1, 3 * H), jnp.float32, -bnd, bnd),
        # dynamic fusion
        'w1_T': xavier(ks[4], (q, Hs), jnp.float32).T,     # linear1 (with bias)
        'b1': jax.random.uniform(ks[5], (1, q), jnp.float32,
                                 -1.0 / jnp.sqrt(Hs), 1.0 / jnp.sqrt(Hs)),
        'w2_T': xavier(ks[6], (q, H), jnp.float32).T,      # linear2 (no bias)
        'ts': jax.random.normal(ks[7], (q, 1), jnp.float32),
        # output head
        'wo_T': xavier(ks[8], (2, H), jnp.float32).T,
        'bo': jax.random.uniform(ks[9], (1, 2), jnp.float32,
                                 -1.0 / jnp.sqrt(H), 1.0 / jnp.sqrt(H)),
    }
    return params


if __name__ == "__main__":
    B, T = 2, 8                 # batch, max_utter_num
    inter_size = 32             # args.inter_size
    hidden_size_ma = 32         # args.hidden_size_ma
    hidden_size = 32            # args.hidden_size (for h_u / linear1)
    q = 16                      # args.q

    key = jax.random.PRNGKey(0)
    kp, kx, kh = jax.random.split(key, 3)
    params = init_params(kp, inter_size, hidden_size_ma, hidden_size, q)

    match = jax.random.normal(kx, (B, T, inter_size), jnp.float32)
    h_u = jax.random.normal(kh, (B, T, hidden_size), jnp.float32)
    num_utterance = jnp.array([T, 5], dtype=jnp.int32)

    run = jax.jit(matching_accumulation)
    g = jax.block_until_ready(run(num_utterance, match, h_u, params))

    g_ref = reference(num_utterance, match, h_u, params)
    assert g.shape == (B, 2)
    # bf16 MXU operands (f32 accumulate) vs a pure-f32 reference -> loosened
    # tolerance; with f32 operands this kernel matches the reference to ~1e-4.
    assert jnp.allclose(g, g_ref, atol=1e-1, rtol=1e-1), (g, g_ref)
    print("KERNEL_OK")
</pallas_src>

<mosaic_0001>
module attributes {stable_mosaic.version = 11 : i64} {
  func.func @ma_kernel(%arg0: memref<16x1xf32, #tpu.memory_space<vmem>>, %arg1: memref<16x32xbf16, #tpu.memory_space<vmem>>, %arg2: memref<16x32xbf16, #tpu.memory_space<vmem>>, %arg3: memref<32x96xbf16, #tpu.memory_space<vmem>>, %arg4: memref<32x96xbf16, #tpu.memory_space<vmem>>, %arg5: memref<1x96xf32, #tpu.memory_space<vmem>>, %arg6: memref<1x32xf32, #tpu.memory_space<vmem>>, %arg7: memref<64x16xbf16, #tpu.memory_space<vmem>>, %arg8: memref<1x16xf32, #tpu.memory_space<vmem>>, %arg9: memref<16x1xbf16, #tpu.memory_space<vmem>>, %arg10: memref<32x2xbf16, #tpu.memory_space<vmem>>, %arg11: memref<1x2xf32, #tpu.memory_space<vmem>>, %arg12: memref<2x2xf32, #tpu.memory_space<vmem>>) attributes {dimension_semantics = [], scalar_prefetch = 0 : i64, scratch_operands = 0 : i64, tpu.core_type = #tpu.core_type<tc>} {
    %c0 = arith.constant 0 : index
    %c0_0 = arith.constant 0 : index
    %0 = vector.load %arg1[%c0, %c0_0] : memref<16x32xbf16, #tpu.memory_space<vmem>>, vector<16x32xbf16>
    %c0_1 = arith.constant 0 : index
    %c0_2 = arith.constant 0 : index
    %1 = vector.load %arg3[%c0_1, %c0_2] : memref<32x96xbf16, #tpu.memory_space<vmem>>, vector<32x96xbf16>
    %cst = arith.constant dense<0.000000e+00> : vector<16x96xf32>
    %2 = tpu.matmul %0, %1, %cst {dimension_numbers = #tpu.dot_dimension_numbers<[1], [0], [0], [1], [0, 0, 1, 1], [], []>} : vector<16x32xbf16>, vector<32x96xbf16>, vector<16x96xf32> -> vector<16x96xf32>
    %c0_3 = arith.constant 0 : index
    %c0_4 = arith.constant 0 : index
    %3 = vector.load %arg5[%c0_3, %c0_4] : memref<1x96xf32, #tpu.memory_space<vmem>>, vector<1x96xf32>
    %4 = vector.broadcast %3 : vector<1x96xf32> to vector<16x96xf32>
    %5 = arith.addf %2, %4 : vector<16x96xf32>
    %c0_5 = arith.constant 0 : index
    %c0_6 = arith.constant 0 : index
    %6 = vector.load %arg4[%c0_5, %c0_6] : memref<32x96xbf16, #tpu.memory_space<vmem>>, vector<32x96xbf16>
    %c0_7 = arith.constant 0 : index
    %c0_8 = arith.constant 0 : index
    %7 = vector.load %arg6[%c0_7, %c0_8] : memref<1x32xf32, #tpu.memory_space<vmem>>, vector<1x32xf32>
    %c0_9 = arith.constant 0 : index
    %c0_10 = arith.constant 0 : index
    %8 = vector.load %arg0[%c0_9, %c0_10] : memref<16x1xf32, #tpu.memory_space<vmem>>, vector<16x1xf32>
    %cst_11 = arith.constant 0.000000e+00 : f32
    %9 = vector.broadcast %cst_11 : f32 to vector<2x32xf32>
    %10 = arith.truncf %9 : vector<2x32xf32> to vector<2x32xbf16>
    %cst_12 = arith.constant dense<0.000000e+00> : vector<2x96xf32>
    %11 = tpu.matmul %10, %6, %cst_12 {dimension_numbers = #tpu.dot_dimension_numbers<[1], [0], [0], [1], [0, 0, 1, 1], [], []>} : vector<2x32xbf16>, vector<32x96xbf16>, vector<2x96xf32> -> vector<2x96xf32>
    %12 = vector.extract_strided_slice %5 {offsets = [0, 0], sizes = [2, 96], strides = [1, 1]} : vector<16x96xf32> to vector<2x96xf32>
    %13 = vector.extract_strided_slice %12 {offsets = [0, 0], sizes = [2, 32], strides = [1, 1]} : vector<2x96xf32> to vector<2x32xf32>
    %14 = vector.extract_strided_slice %11 {offsets = [0, 0], sizes = [2, 32], strides = [1, 1]} : vector<2x96xf32> to vector<2x32xf32>
    %15 = arith.addf %13, %14 : vector<2x32xf32>
    %16 = arith.negf %15 : vector<2x32xf32>
    %17 = math.exp %16 : vector<2x32xf32>
    %cst_13 = arith.constant 1.000000e+00 : f32
    %18 = vector.broadcast %cst_13 : f32 to vector<2x32xf32>
    %19 = arith.addf %18, %17 : vector<2x32xf32>
    %20 = arith.divf %18, %19 : vector<2x32xf32>
    %21 = vector.extract_strided_slice %12 {offsets = [0, 32], sizes = [2, 32], strides = [1, 1]} : vector<2x96xf32> to vector<2x32xf32>
    %22 = vector.extract_strided_slice %11 {offsets = [0, 32], sizes = [2, 32], strides = [1, 1]} : vector<2x96xf32> to vector<2x32xf32>
    %23 = arith.addf %21, %22 : vector<2x32xf32>
    %24 = arith.negf %23 : vector<2x32xf32>
    %25 = math.exp %24 : vector<2x32xf32>
    %cst_14 = arith.constant 1.000000e+00 : f32
    %26 = vector.broadcast %cst_14 : f32 to vector<2x32xf32>
    %27 = arith.addf %26, %25 : vector<2x32xf32>
    %28 = arith.divf %26, %27 : vector<2x32xf32>
    %29 = vector.extract_strided_slice %12 {offsets = [0, 64], sizes = [2, 32], strides = [1, 1]} : vector<2x96xf32> to vector<2x32xf32>
    %30 = vector.extract_strided_slice %11 {offsets = [0, 64], sizes = [2, 32], strides = [1, 1]} : vector<2x96xf32> to vector<2x32xf32>
    %31 = vector.broadcast %7 : vector<1x32xf32> to vector<2x32xf32>
    %32 = arith.addf %30, %31 : vector<2x32xf32>
    %33 = arith.mulf %20, %32 : vector<2x32xf32>
    %34 = arith.addf %29, %33 : vector<2x32xf32>
    %35 = math.tanh %34 : vector<2x32xf32>
    %36 = arith.subf %9, %35 : vector<2x32xf32>
    %37 = arith.mulf %28, %36 : vector<2x32xf32>
    %38 = arith.addf %35, %37 : vector<2x32xf32>
    %39 = vector.extract_strided_slice %8 {offsets = [0, 0], sizes = [2, 1], strides = [1, 1]} : vector<16x1xf32> to vector<2x1xf32>
    %40 = vector.broadcast %39 : vector<2x1xf32> to vector<2x32xf32>
    %41 = arith.mulf %38, %40 : vector<2x32xf32>
    %42 = arith.truncf %38 : vector<2x32xf32> to vector<2x32xbf16>
    %cst_15 = arith.constant dense<0.000000e+00> : vector<2x96xf32>
    %43 = tpu.matmul %42, %6, %cst_15 {dimension_numbers = #tpu.dot_dimension_numbers<[1], [0], [0], [1], [0, 0, 1, 1], [], []>} : vector<2x32xbf16>, vector<32x96xbf16>, vector<2x96xf32> -> vector<2x96xf32>
    %44 = vector.extract_strided_slice %5 {offsets = [2, 0], sizes = [2, 96], strides = [1, 1]} : vector<16x96xf32> to vector<2x96xf32>
    %45 = vector.extract_strided_slice %44 {offsets = [0, 0], sizes = [2, 32], strides = [1, 1]} : vector<2x96xf32> to vector<2x32xf32>
    %46 = vector.extract_strided_slice %43 {offsets = [0, 0], sizes = [2, 32], strides = [1, 1]} : vector<2x96xf32> to vector<2x32xf32>
    %47 = arith.addf %45, %46 : vector<2x32xf32>
    %48 = arith.negf %47 : vector<2x32xf32>
    %49 = math.exp %48 : vector<2x32xf32>
    %cst_16 = arith.constant 1.000000e+00 : f32
    %50 = vector.broadcast %cst_16 : f32 to vector<2x32xf32>
    %51 = arith.addf %50, %49 : vector<2x32xf32>
    %52 = arith.divf %50, %51 : vector<2x32xf32>
    %53 = vector.extract_strided_slice %44 {offsets = [0, 32], sizes = [2, 32], strides = [1, 1]} : vector<2x96xf32> to vector<2x32xf32>
    %54 = vector.extract_strided_slice %43 {offsets = [0, 32], sizes = [2, 32], strides = [1, 1]} : vector<2x96xf32> to vector<2x32xf32>
    %55 = arith.addf %53, %54 : vector<2x32xf32>
    %56 = arith.negf %55 : vector<2x32xf32>
    %57 = math.exp %56 : vector<2x32xf32>
    %cst_17 = arith.constant 1.000000e+00 : f32
    %58 = vector.broadcast %cst_17 : f32 to vector<2x32xf32>
    %59 = arith.addf %58, %57 : vector<2x32xf32>
    %60 = arith.divf %58, %59 : vector<2x32xf32>
    %61 = vector.extract_strided_slice %44 {offsets = [0, 64], sizes = [2, 32], strides = [1, 1]} : vector<2x96xf32> to vector<2x32xf32>
    %62 = vector.extract_strided_slice %43 {offsets = [0, 64], sizes = [2, 32], strides = [1, 1]} : vector<2x96xf32> to vector<2x32xf32>
    %63 = vector.broadcast %7 : vector<1x32xf32> to vector<2x32xf32>
    %64 = arith.addf %62, %63 : vector<2x32xf32>
    %65 = arith.mulf %52, %64 : vector<2x32xf32>
    %66 = arith.addf %61, %65 : vector<2x32xf32>
    %67 = math.tanh %66 : vector<2x32xf32>
    %68 = arith.subf %38, %67 : vector<2x32xf32>
    %69 = arith.mulf %60, %68 : vector<2x32xf32>
    %70 = arith.addf %67, %69 : vector<2x32xf32>
    %71 = vector.extract_strided_slice %8 {offsets = [2, 0], sizes = [2, 1], strides = [1, 1]} : vector<16x1xf32> to vector<2x1xf32>
    %72 = vector.broadcast %71 : vector<2x1xf32> to vector<2x32xf32>
    %73 = arith.mulf %70, %72 : vector<2x32xf32>
    %74 = arith.truncf %70 : vector<2x32xf32> to vector<2x32xbf16>
    %cst_18 = arith.constant dense<0.000000e+00> : vector<2x96xf32>
    %75 = tpu.matmul %74, %6, %cst_18 {dimension_numbers = #tpu.dot_dimension_numbers<[1], [0], [0], [1], [0, 0, 1, 1], [], []>} : vector<2x32xbf16>, vector<32x96xbf16>, vector<2x96xf32> -> vector<2x96xf32>
    %76 = vector.extract_strided_slice %5 {offsets = [4, 0], sizes = [2, 96], strides = [1, 1]} : vector<16x96xf32> to vector<2x96xf32>
    %77 = vector.extract_strided_slice %76 {offsets = [0, 0], sizes = [2, 32], strides = [1, 1]} : vector<2x96xf32> to vector<2x32xf32>
    %78 = vector.extract_strided_slice %75 {offsets = [0, 0], sizes = [2, 32], strides = [1, 1]} : vector<2x96xf32> to vector<2x32xf32>
    %79 = arith.addf %77, %78 : vector<2x32xf32>
    %80 = arith.negf %79 : vector<2x32xf32>
    %81 = math.exp %80 : vector<2x32xf32>
    %cst_19 = arith.constant 1.000000e+00 : f32
    %82 = vector.broadcast %cst_19 : f32 to vector<2x32xf32>
    %83 = arith.addf %82, %81 : vector<2x32xf32>
    %84 = arith.divf %82, %83 : vector<2x32xf32>
    %85 = vector.extract_strided_slice %76 {offsets = [0, 32], sizes = [2, 32], strides = [1, 1]} : vector<2x96xf32> to vector<2x32xf32>
    %86 = vector.extract_strided_slice %75 {offsets = [0, 32], sizes = [2, 32], strides = [1, 1]} : vector<2x96xf32> to vector<2x32xf32>
    %87 = arith.addf %85, %86 : vector<2x32xf32>
    %88 = arith.negf %87 : vector<2x32xf32>
    %89 = math.exp %88 : vector<2x32xf32>
    %cst_20 = arith.constant 1.000000e+00 : f32
    %90 = vector.broadcast %cst_20 : f32 to vector<2x32xf32>
    %91 = arith.addf %90, %89 : vector<2x32xf32>
    %92 = arith.divf %90, %91 : vector<2x32xf32>
    %93 = vector.extract_strided_slice %76 {offsets = [0, 64], sizes = [2, 32], strides = [1, 1]} : vector<2x96xf32> to vector<2x32xf32>
    %94 = vector.extract_strided_slice %75 {offsets = [0, 64], sizes = [2, 32], strides = [1, 1]} : vector<2x96xf32> to vector<2x32xf32>
    %95 = vector.broadcast %7 : vector<1x32xf32> to vector<2x32xf32>
    %96 = arith.addf %94, %95 : vector<2x32xf32>
    %97 = arith.mulf %84, %96 : vector<2x32xf32>
    %98 = arith.addf %93, %97 : vector<2x32xf32>
    %99 = math.tanh %98 : vector<2x32xf32>
    %100 = arith.subf %70, %99 : vector<2x32xf32>
    %101 = arith.mulf %92, %100 : vector<2x32xf32>
    %102 = arith.addf %99, %101 : vector<2x32xf32>
    %103 = vector.extract_strided_slice %8 {offsets = [4, 0], sizes = [2, 1], strides = [1, 1]} : vector<16x1xf32> to vector<2x1xf32>
    %104 = vector.broadcast %103 : vector<2x1xf32> to vector<2x32xf32>
    %105 = arith.mulf %102, %104 : vector<2x32xf32>
    %106 = arith.truncf %102 : vector<2x32xf32> to vector<2x32xbf16>
    %cst_21 = arith.constant dense<0.000000e+00> : vector<2x96xf32>
    %107 = tpu.matmul %106, %6, %cst_21 {dimension_numbers = #tpu.dot_dimension_numbers<[1], [0], [0], [1], [0, 0, 1, 1], [], []>} : vector<2x32xbf16>, vector<32x96xbf16>, vector<2x96xf32> -> vector<2x96xf32>
    %108 = vector.extract_strided_slice %5 {offsets = [6, 0], sizes = [2, 96], strides = [1, 1]} : vector<16x96xf32> to vector<2x96xf32>
    %109 = vector.extract_strided_slice %108 {offsets = [0, 0], sizes = [2, 32], strides = [1, 1]} : vector<2x96xf32> to vector<2x32xf32>
    %110 = vector.extract_strided_slice %107 {offsets = [0, 0], sizes = [2, 32], strides = [1, 1]} : vector<2x96xf32> to vector<2x32xf32>
    %111 = arith.addf %109, %110 : vector<2x32xf32>
    %112 = arith.negf %111 : vector<2x32xf32>
    %113 = math.exp %112 : vector<2x32xf32>
    %cst_22 = arith.constant 1.000000e+00 : f32
    %114 = vector.broadcast %cst_22 : f32 to vector<2x32xf32>
    %115 = arith.addf %114, %113 : vector<2x32xf32>
    %116 = arith.divf %114, %115 : vector<2x32xf32>
    %117 = vector.extract_strided_slice %108 {offsets = [0, 32], sizes = [2, 32], strides = [1, 1]} : vector<2x96xf32> to vector<2x32xf32>
    %118 = vector.extract_strided_slice %107 {offsets = [0, 32], sizes = [2, 32], strides = [1, 1]} : vector<2x96xf32> to vector<2x32xf32>
    %119 = arith.addf %117, %118 : vector<2x32xf32>
    %120 = arith.negf %119 : vector<2x32xf32>
    %121 = math.exp %120 : vector<2x32xf32>
    %cst_23 = arith.constant 1.000000e+00 : f32
    %122 = vector.broadcast %cst_23 : f32 to vector<2x32xf32>
    %123 = arith.addf %122, %121 : vector<2x32xf32>
    %124 = arith.divf %122, %123 : vector<2x32xf32>
    %125 = vector.extract_strided_slice %108 {offsets = [0, 64], sizes = [2, 32], strides = [1, 1]} : vector<2x96xf32> to vector<2x32xf32>
    %126 = vector.extract_strided_slice %107 {offsets = [0, 64], sizes = [2, 32], strides = [1, 1]} : vector<2x96xf32> to vector<2x32xf32>
    %127 = vector.broadcast %7 : vector<1x32xf32> to vector<2x32xf32>
    %128 = arith.addf %126, %127 : vector<2x32xf32>
    %129 = arith.mulf %116, %128 : vector<2x32xf32>
    %130 = arith.addf %125, %129 : vector<2x32xf32>
    %131 = math.tanh %130 : vector<2x32xf32>
    %132 = arith.subf %102, %131 : vector<2x32xf32>
    %133 = arith.mulf %124, %132 : vector<2x32xf32>
    %134 = arith.addf %131, %133 : vector<2x32xf32>
    %135 = vector.extract_strided_slice %8 {offsets = [6, 0], sizes = [2, 1], strides = [1, 1]} : vector<16x1xf32> to vector<2x1xf32>
    %136 = vector.broadcast %135 : vector<2x1xf32> to vector<2x32xf32>
    %137 = arith.mulf %134, %136 : vector<2x32xf32>
    %138 = arith.truncf %134 : vector<2x32xf32> to vector<2x32xbf16>
    %cst_24 = arith.constant dense<0.000000e+00> : vector<2x96xf32>
    %139 = tpu.matmul %138, %6, %cst_24 {dimension_numbers = #tpu.dot_dimension_numbers<[1], [0], [0], [1], [0, 0, 1, 1], [], []>} : vector<2x32xbf16>, vector<32x96xbf16>, vector<2x96xf32> -> vector<2x96xf32>
    %140 = vector.extract_strided_slice %5 {offsets = [8, 0], sizes = [2, 96], strides = [1, 1]} : vector<16x96xf32> to vector<2x96xf32>
    %141 = vector.extract_strided_slice %140 {offsets = [0, 0], sizes = [2, 32], strides = [1, 1]} : vector<2x96xf32> to vector<2x32xf32>
    %142 = vector.extract_strided_slice %139 {offsets = [0, 0], sizes = [2, 32], strides = [1, 1]} : vector<2x96xf32> to vector<2x32xf32>
    %143 = arith.addf %141, %142 : vector<2x32xf32>
    %144 = arith.negf %143 : vector<2x32xf32>
    %145 = math.exp %144 : vector<2x32xf32>
    %cst_25 = arith.constant 1.000000e+00 : f32
    %146 = vector.broadcast %cst_25 : f32 to vector<2x32xf32>
    %147 = arith.addf %146, %145 : vector<2x32xf32>
    %148 = arith.divf %146, %147 : vector<2x32xf32>
    %149 = vector.extract_strided_slice %140 {offsets = [0, 32], sizes = [2, 32], strides = [1, 1]} : vector<2x96xf32> to vector<2x32xf32>
    %150 = vector.extract_strided_slice %139 {offsets = [0, 32], sizes = [2, 32], strides = [1, 1]} : vector<2x96xf32> to vector<2x32xf32>
    %151 = arith.addf %149, %150 : vector<2x32xf32>
    %152 = arith.negf %151 : vector<2x32xf32>
    %153 = math.exp %152 : vector<2x32xf32>
    %cst_26 = arith.constant 1.000000e+00 : f32
    %154 = vector.broadcast %cst_26 : f32 to vector<2x32xf32>
    %155 = arith.addf %154, %153 : vector<2x32xf32>
    %156 = arith.divf %154, %155 : vector<2x32xf32>
    %157 = vector.extract_strided_slice %140 {offsets = [0, 64], sizes = [2, 32], strides = [1, 1]} : vector<2x96xf32> to vector<2x32xf32>
    %158 = vector.extract_strided_slice %139 {offsets = [0, 64], sizes = [2, 32], strides = [1, 1]} : vector<2x96xf32> to vector<2x32xf32>
    %159 = vector.broadcast %7 : vector<1x32xf32> to vector<2x32xf32>
    %160 = arith.addf %158, %159 : vector<2x32xf32>
    %161 = arith.mulf %148, %160 : vector<2x32xf32>
    %162 = arith.addf %157, %161 : vector<2x32xf32>
    %163 = math.tanh %162 : vector<2x32xf32>
    %164 = arith.subf %134, %163 : vector<2x32xf32>
    %165 = arith.mulf %156, %164 : vector<2x32xf32>
    %166 = arith.addf %163, %165 : vector<2x32xf32>
    %167 = vector.extract_strided_slice %8 {offsets = [8, 0], sizes = [2, 1], strides = [1, 1]} : vector<16x1xf32> to vector<2x1xf32>
    %168 = vector.broadcast %167 : vector<2x1xf32> to vector<2x32xf32>
    %169 = arith.mulf %166, %168 : vector<2x32xf32>
    %170 = arith.truncf %166 : vector<2x32xf32> to vector<2x32xbf16>
    %cst_27 = arith.constant dense<0.000000e+00> : vector<2x96xf32>
    %171 = tpu.matmul %170, %6, %cst_27 {dimension_numbers = #tpu.dot_dimension_numbers<[1], [0], [0], [1], [0, 0, 1, 1], [], []>} : vector<2x32xbf16>, vector<32x96xbf16>, vector<2x96xf32> -> vector<2x96xf32>
    %172 = vector.extract_strided_slice %5 {offsets = [10, 0], sizes = [2, 96], strides = [1, 1]} : vector<16x96xf32> to vector<2x96xf32>
    %173 = vector.extract_strided_slice %172 {offsets = [0, 0], sizes = [2, 32], strides = [1, 1]} : vector<2x96xf32> to vector<2x32xf32>
    %174 = vector.extract_strided_slice %171 {offsets = [0, 0], sizes = [2, 32], strides = [1, 1]} : vector<2x96xf32> to vector<2x32xf32>
    %175 = arith.addf %173, %174 : vector<2x32xf32>
    %176 = arith.negf %175 : vector<2x32xf32>
    %177 = math.exp %176 : vector<2x32xf32>
    %cst_28 = arith.constant 1.000000e+00 : f32
    %178 = vector.broadcast %cst_28 : f32 to vector<2x32xf32>
    %179 = arith.addf %178, %177 : vector<2x32xf32>
    %180 = arith.divf %178, %179 : vector<2x32xf32>
    %181 = vector.extract_strided_slice %172 {offsets = [0, 32], sizes = [2, 32], strides = [1, 1]} : vector<2x96xf32> to vector<2x32xf32>
    %182 = vector.extract_strided_slice %171 {offsets = [0, 32], sizes = [2, 32], strides = [1, 1]} : vector<2x96xf32> to vector<2x32xf32>
    %183 = arith.addf %181, %182 : vector<2x32xf32>
    %184 = arith.negf %183 : vector<2x32xf32>
    %185 = math.exp %184 : vector<2x32xf32>
    %cst_29 = arith.constant 1.000000e+00 : f32
    %186 = vector.broadcast %cst_29 : f32 to vector<2x32xf32>
    %187 = arith.addf %186, %185 : vector<2x32xf32>
    %188 = arith.divf %186, %187 : vector<2x32xf32>
    %189 = vector.extract_strided_slice %172 {offsets = [0, 64], sizes = [2, 32], strides = [1, 1]} : vector<2x96xf32> to vector<2x32xf32>
    %190 = vector.extract_strided_slice %171 {offsets = [0, 64], sizes = [2, 32], strides = [1, 1]} : vector<2x96xf32> to vector<2x32xf32>
    %191 = vector.broadcast %7 : vector<1x32xf32> to vector<2x32xf32>
    %192 = arith.addf %190, %191 : vector<2x32xf32>
    %193 = arith.mulf %180, %192 : vector<2x32xf32>
    %194 = arith.addf %189, %193 : vector<2x32xf32>
    %195 = math.tanh %194 : vector<2x32xf32>
    %196 = arith.subf %166, %195 : vector<2x32xf32>
    %197 = arith.mulf %188, %196 : vector<2x32xf32>
    %198 = arith.addf %195, %197 : vector<2x32xf32>
    %199 = vector.extract_strided_slice %8 {offsets = [10, 0], sizes = [2, 1], strides = [1, 1]} : vector<16x1xf32> to vector<2x1xf32>
    %200 = vector.broadcast %199 : vector<2x1xf32> to vector<2x32xf32>
    %201 = arith.mulf %198, %200 : vector<2x32xf32>
    %202 = arith.truncf %198 : vector<2x32xf32> to vector<2x32xbf16>
    %cst_30 = arith.constant dense<0.000000e+00> : vector<2x96xf32>
    %203 = tpu.matmul %202, %6, %cst_30 {dimension_numbers = #tpu.dot_dimension_numbers<[1], [0], [0], [1], [0, 0, 1, 1], [], []>} : vector<2x32xbf16>, vector<32x96xbf16>, vector<2x96xf32> -> vector<2x96xf32>
    %204 = vector.extract_strided_slice %5 {offsets = [12, 0], sizes = [2, 96], strides = [1, 1]} : vector<16x96xf32> to vector<2x96xf32>
    %205 = vector.extract_strided_slice %204 {offsets = [0, 0], sizes = [2, 32], strides = [1, 1]} : vector<2x96xf32> to vector<2x32xf32>
    %206 = vector.extract_strided_slice %203 {offsets = [0, 0], sizes = [2, 32], strides = [1, 1]} : vector<2x96xf32> to vector<2x32xf32>
    %207 = arith.addf %205, %206 : vector<2x32xf32>
    %208 = arith.negf %207 : vector<2x32xf32>
    %209 = math.exp %208 : vector<2x32xf32>
    %cst_31 = arith.constant 1.000000e+00 : f32
    %210 = vector.broadcast %cst_31 : f32 to vector<2x32xf32>
    %211 = arith.addf %210, %209 : vector<2x32xf32>
    %212 = arith.divf %210, %211 : vector<2x32xf32>
    %213 = vector.extract_strided_slice %204 {offsets = [0, 32], sizes = [2, 32], strides = [1, 1]} : vector<2x96xf32> to vector<2x32xf32>
    %214 = vector.extract_strided_slice %203 {offsets = [0, 32], sizes = [2, 32], strides = [1, 1]} : vector<2x96xf32> to vector<2x32xf32>
    %215 = arith.addf %213, %214 : vector<2x32xf32>
    %216 = arith.negf %215 : vector<2x32xf32>
    %217 = math.exp %216 : vector<2x32xf32>
    %cst_32 = arith.constant 1.000000e+00 : f32
    %218 = vector.broadcast %cst_32 : f32 to vector<2x32xf32>
    %219 = arith.addf %218, %217 : vector<2x32xf32>
    %220 = arith.divf %218, %219 : vector<2x32xf32>
    %221 = vector.extract_strided_slice %204 {offsets = [0, 64], sizes = [2, 32], strides = [1, 1]} : vector<2x96xf32> to vector<2x32xf32>
    %222 = vector.extract_strided_slice %203 {offsets = [0, 64], sizes = [2, 32], strides = [1, 1]} : vector<2x96xf32> to vector<2x32xf32>
    %223 = vector.broadcast %7 : vector<1x32xf32> to vector<2x32xf32>
    %224 = arith.addf %222, %223 : vector<2x32xf32>
    %225 = arith.mulf %212, %224 : vector<2x32xf32>
    %226 = arith.addf %221, %225 : vector<2x32xf32>
    %227 = math.tanh %226 : vector<2x32xf32>
    %228 = arith.subf %198, %227 : vector<2x32xf32>
    %229 = arith.mulf %220, %228 : vector<2x32xf32>
    %230 = arith.addf %227, %229 : vector<2x32xf32>
    %231 = vector.extract_strided_slice %8 {offsets = [12, 0], sizes = [2, 1], strides = [1, 1]} : vector<16x1xf32> to vector<2x1xf32>
    %232 = vector.broadcast %231 : vector<2x1xf32> to vector<2x32xf32>
    %233 = arith.mulf %230, %232 : vector<2x32xf32>
    %234 = arith.truncf %230 : vector<2x32xf32> to vector<2x32xbf16>
    %cst_33 = arith.constant dense<0.000000e+00> : vector<2x96xf32>
    %235 = tpu.matmul %234, %6, %cst_33 {dimension_numbers = #tpu.dot_dimension_numbers<[1], [0], [0], [1], [0, 0, 1, 1], [], []>} : vector<2x32xbf16>, vector<32x96xbf16>, vector<2x96xf32> -> vector<2x96xf32>
    %236 = vector.extract_strided_slice %5 {offsets = [14, 0], sizes = [2, 96], strides = [1, 1]} : vector<16x96xf32> to vector<2x96xf32>
    %237 = vector.extract_strided_slice %236 {offsets = [0, 0], sizes = [2, 32], strides = [1, 1]} : vector<2x96xf32> to vector<2x32xf32>
    %238 = vector.extract_strided_slice %235 {offsets = [0, 0], sizes = [2, 32], strides = [1, 1]} : vector<2x96xf32> to vector<2x32xf32>
    %239 = arith.addf %237, %238 : vector<2x32xf32>
    %240 = arith.negf %239 : vector<2x32xf32>
    %241 = math.exp %240 : vector<2x32xf32>
    %cst_34 = arith.constant 1.000000e+00 : f32
    %242 = vector.broadcast %cst_34 : f32 to vector<2x32xf32>
    %243 = arith.addf %242, %241 : vector<2x32xf32>
    %244 = arith.divf %242, %243 : vector<2x32xf32>
    %245 = vector.extract_strided_slice %236 {offsets = [0, 32], sizes = [2, 32], strides = [1, 1]} : vector<2x96xf32> to vector<2x32xf32>
    %246 = vector.extract_strided_slice %235 {offsets = [0, 32], sizes = [2, 32], strides = [1, 1]} : vector<2x96xf32> to vector<2x32xf32>
    %247 = arith.addf %245, %246 : vector<2x32xf32>
    %248 = arith.negf %247 : vector<2x32xf32>
    %249 = math.exp %248 : vector<2x32xf32>
    %cst_35 = arith.constant 1.000000e+00 : f32
    %250 = vector.broadcast %cst_35 : f32 to vector<2x32xf32>
    %251 = arith.addf %250, %249 : vector<2x32xf32>
    %252 = arith.divf %250, %251 : vector<2x32xf32>
    %253 = vector.extract_strided_slice %236 {offsets = [0, 64], sizes = [2, 32], strides = [1, 1]} : vector<2x96xf32> to vector<2x32xf32>
    %254 = vector.extract_strided_slice %235 {offsets = [0, 64], sizes = [2, 32], strides = [1, 1]} : vector<2x96xf32> to vector<2x32xf32>
    %255 = vector.broadcast %7 : vector<1x32xf32> to vector<2x32xf32>
    %256 = arith.addf %254, %255 : vector<2x32xf32>
    %257 = arith.mulf %244, %256 : vector<2x32xf32>
    %258 = arith.addf %253, %257 : vector<2x32xf32>
    %259 = math.tanh %258 : vector<2x32xf32>
    %260 = arith.subf %230, %259 : vector<2x32xf32>
    %261 = arith.mulf %252, %260 : vector<2x32xf32>
    %262 = arith.addf %259, %261 : vector<2x32xf32>
    %263 = vector.extract_strided_slice %8 {offsets = [14, 0], sizes = [2, 1], strides = [1, 1]} : vector<16x1xf32> to vector<2x1xf32>
    %264 = vector.broadcast %263 : vector<2x1xf32> to vector<2x32xf32>
    %265 = arith.mulf %262, %264 : vector<2x32xf32>
    %266 = tpu.concatenate %41, %73, %105, %137, %169, %201, %233, %265 in 0 : vector<2x32xf32>, vector<2x32xf32>, vector<2x32xf32>, vector<2x32xf32>, vector<2x32xf32>, vector<2x32xf32>, vector<2x32xf32>, vector<2x32xf32> -> vector<16x32xf32>
    %c0_36 = arith.constant 0 : index
    %c0_37 = arith.constant 0 : index
    %267 = vector.load %arg2[%c0_36, %c0_37] : memref<16x32xbf16, #tpu.memory_space<vmem>>, vector<16x32xbf16>
    %268 = arith.truncf %266 : vector<16x32xf32> to vector<16x32xbf16>
    %269 = tpu.concatenate %267, %268 in 1 : vector<16x32xbf16>, vector<16x32xbf16> -> vector<16x64xbf16>
    %c0_38 = arith.constant 0 : index
    %c0_39 = arith.constant 0 : index
    %270 = vector.load %arg7[%c0_38, %c0_39] : memref<64x16xbf16, #tpu.memory_space<vmem>>, vector<64x16xbf16>
    %cst_40 = arith.constant dense<0.000000e+00> : vector<16x16xf32>
    %271 = tpu.matmul %269, %270, %cst_40 {dimension_numbers = #tpu.dot_dimension_numbers<[1], [0], [0], [1], [0, 0, 1, 1], [], []>} : vector<16x64xbf16>, vector<64x16xbf16>, vector<16x16xf32> -> vector<16x16xf32>
    %c0_41 = arith.constant 0 : index
    %c0_42 = arith.constant 0 : index
    %272 = vector.load %arg8[%c0_41, %c0_42] : memref<1x16xf32, #tpu.memory_space<vmem>>, vector<1x16xf32>
    %273 = vector.broadcast %272 : vector<1x16xf32> to vector<16x16xf32>
    %274 = arith.addf %271, %273 : vector<16x16xf32>
    %275 = math.tanh %274 : vector<16x16xf32>
    %276 = arith.truncf %275 : vector<16x16xf32> to vector<16x16xbf16>
    %c0_43 = arith.constant 0 : index
    %c0_44 = arith.constant 0 : index
    %277 = vector.load %arg9[%c0_43, %c0_44] : memref<16x1xbf16, #tpu.memory_space<vmem>>, vector<16x1xbf16>
    %cst_45 = arith.constant dense<0.000000e+00> : vector<16x1xf32>
    %278 = tpu.matmul %276, %277, %cst_45 {dimension_numbers = #tpu.dot_dimension_numbers<[1], [0], [0], [1], [0, 0, 1, 1], [], []>} : vector<16x16xbf16>, vector<16x1xbf16>, vector<16x1xf32> -> vector<16x1xf32>
    %279 = vector.extract_strided_slice %278 {offsets = [0, 0], sizes = [2, 1], strides = [1, 1]} : vector<16x1xf32> to vector<2x1xf32>
    %280 = vector.extract_strided_slice %278 {offsets = [2, 0], sizes = [2, 1], strides = [1, 1]} : vector<16x1xf32> to vector<2x1xf32>
    %281 = vector.extract_strided_slice %278 {offsets = [4, 0], sizes = [2, 1], strides = [1, 1]} : vector<16x1xf32> to vector<2x1xf32>
    %282 = vector.extract_strided_slice %278 {offsets = [6, 0], sizes = [2, 1], strides = [1, 1]} : vector<16x1xf32> to vector<2x1xf32>
    %283 = vector.extract_strided_slice %278 {offsets = [8, 0], sizes = [2, 1], strides = [1, 1]} : vector<16x1xf32> to vector<2x1xf32>
    %284 = vector.extract_strided_slice %278 {offsets = [10, 0], sizes = [2, 1], strides = [1, 1]} : vector<16x1xf32> to vector<2x1xf32>
    %285 = vector.extract_strided_slice %278 {offsets = [12, 0], sizes = [2, 1], strides = [1, 1]} : vector<16x1xf32> to vector<2x1xf32>
    %286 = vector.extract_strided_slice %278 {offsets = [14, 0], sizes = [2, 1], strides = [1, 1]} : vector<16x1xf32> to vector<2x1xf32>
    %287 = tpu.concatenate %279, %280, %281, %282, %283, %284, %285, %286 in 1 : vector<2x1xf32>, vector<2x1xf32>, vector<2x1xf32>, vector<2x1xf32>, vector<2x1xf32>, vector<2x1xf32>, vector<2x1xf32>, vector<2x1xf32> -> vector<2x8xf32>
    %cst_46 = arith.constant dense<0xFF800000> : vector<2xf32>
    %288 = vector.multi_reduction <maximumf>, %287, %cst_46 [1] : vector<2x8xf32> to vector<2xf32>
    %289 = vector.shape_cast %288 : vector<2xf32> to vector<2x1xf32>
    %290 = vector.broadcast %289 : vector<2x1xf32> to vector<2x8xf32>
    %291 = arith.subf %287, %290 : vector<2x8xf32>
    %292 = math.exp %291 : vector<2x8xf32>
    %cst_47 = arith.constant dense<0.000000e+00> : vector<2xf32>
    %293 = vector.multi_reduction <add>, %292, %cst_47 [1] : vector<2x8xf32> to vector<2xf32>
    %294 = vector.shape_cast %293 : vector<2xf32> to vector<2x1xf32>
    %295 = tpu.reciprocal %294 {approx = true} : vector<2x1xf32> -> vector<2x1xf32>
    %296 = vector.broadcast %295 : vector<2x1xf32> to vector<2x8xf32>
    %297 = arith.mulf %292, %296 : vector<2x8xf32>
    %cst_48 = arith.constant 0.000000e+00 : f32
    %298 = vector.broadcast %cst_48 : f32 to vector<2x32xf32>
    %299 = vector.extract_strided_slice %297 {offsets = [0, 0], sizes = [2, 1], strides = [1, 1]} : vector<2x8xf32> to vector<2x1xf32>
    %300 = vector.broadcast %299 : vector<2x1xf32> to vector<2x32xf32>
    %301 = arith.mulf %300, %41 : vector<2x32xf32>
    %302 = arith.addf %298, %301 : vector<2x32xf32>
    %303 = vector.extract_strided_slice %297 {offsets = [0, 1], sizes = [2, 1], strides = [1, 1]} : vector<2x8xf32> to vector<2x1xf32>
    %304 = vector.broadcast %303 : vector<2x1xf32> to vector<2x32xf32>
    %305 = arith.mulf %304, %73 : vector<2x32xf32>
    %306 = arith.addf %302, %305 : vector<2x32xf32>
    %307 = vector.extract_strided_slice %297 {offsets = [0, 2], sizes = [2, 1], strides = [1, 1]} : vector<2x8xf32> to vector<2x1xf32>
    %308 = vector.broadcast %307 : vector<2x1xf32> to vector<2x32xf32>
    %309 = arith.mulf %308, %105 : vector<2x32xf32>
    %310 = arith.addf %306, %309 : vector<2x32xf32>
    %311 = vector.extract_strided_slice %297 {offsets = [0, 3], sizes = [2, 1], strides = [1, 1]} : vector<2x8xf32> to vector<2x1xf32>
    %312 = vector.broadcast %311 : vector<2x1xf32> to vector<2x32xf32>
    %313 = arith.mulf %312, %137 : vector<2x32xf32>
    %314 = arith.addf %310, %313 : vector<2x32xf32>
    %315 = vector.extract_strided_slice %297 {offsets = [0, 4], sizes = [2, 1], strides = [1, 1]} : vector<2x8xf32> to vector<2x1xf32>
    %316 = vector.broadcast %315 : vector<2x1xf32> to vector<2x32xf32>
    %317 = arith.mulf %316, %169 : vector<2x32xf32>
    %318 = arith.addf %314, %317 : vector<2x32xf32>
    %319 = vector.extract_strided_slice %297 {offsets = [0, 5], sizes = [2, 1], strides = [1, 1]} : vector<2x8xf32> to vector<2x1xf32>
    %320 = vector.broadcast %319 : vector<2x1xf32> to vector<2x32xf32>
    %321 = arith.mulf %320, %201 : vector<2x32xf32>
    %322 = arith.addf %318, %321 : vector<2x32xf32>
    %323 = vector.extract_strided_slice %297 {offsets = [0, 6], sizes = [2, 1], strides = [1, 1]} : vector<2x8xf32> to vector<2x1xf32>
    %324 = vector.broadcast %323 : vector<2x1xf32> to vector<2x32xf32>
    %325 = arith.mulf %324, %233 : vector<2x32xf32>
    %326 = arith.addf %322, %325 : vector<2x32xf32>
    %327 = vector.extract_strided_slice %297 {offsets = [0, 7], sizes = [2, 1], strides = [1, 1]} : vector<2x8xf32> to vector<2x1xf32>
    %328 = vector.broadcast %327 : vector<2x1xf32> to vector<2x32xf32>
    %329 = arith.mulf %328, %265 : vector<2x32xf32>
    %330 = arith.addf %326, %329 : vector<2x32xf32>
    %331 = arith.truncf %330 : vector<2x32xf32> to vector<2x32xbf16>
    %c0_49 = arith.constant 0 : index
    %c0_50 = arith.constant 0 : index
    %332 = vector.load %arg10[%c0_49, %c0_50] : memref<32x2xbf16, #tpu.memory_space<vmem>>, vector<32x2xbf16>
    %cst_51 = arith.constant dense<0.000000e+00> : vector<2x2xf32>
    %333 = tpu.matmul %331, %332, %cst_51 {dimension_numbers = #tpu.dot_dimension_numbers<[1], [0], [0], [1], [0, 0, 1, 1], [], []>} : vector<2x32xbf16>, vector<32x2xbf16>, vector<2x2xf32> -> vector<2x2xf32>
    %c0_52 = arith.constant 0 : index
    %c0_53 = arith.constant 0 : index
    %334 = vector.load %arg11[%c0_52, %c0_53] : memref<1x2xf32, #tpu.memory_space<vmem>>, vector<1x2xf32>
    %335 = vector.broadcast %334 : vector<1x2xf32> to vector<2x2xf32>
    %336 = arith.addf %333, %335 : vector<2x2xf32>
    %c0_54 = arith.constant 0 : index
    %c0_55 = arith.constant 0 : index
    %337 = vector.load %arg12[%c0_54, %c0_55] : memref<2x2xf32, #tpu.memory_space<vmem>>, vector<2x2xf32>
    tpu.vector_store %arg12[%c0_54, %c0_55], %336 {strides = array<i32>} : memref<2x2xf32, #tpu.memory_space<vmem>>, vector<2x2xf32>,
    return
  }
}

</mosaic_0001>

<llo_original>
// kernel: matching_accumulation.1
$region0: #{matching_accumulation.1}
  #allocation0 [shape = 'u32[]', space=smem, size = 0x4, offset = 0x4, fixed_abs, tag = 'smem constant byte address 0x4 - core index']
  #allocation1 [shape = 'u32[72,128]{1,0:T(1,128)}', space=vmem, size = 0x9000, scoped, tag = 'internal scratch']
  %s0 = inlined_call_operand.vmem [shape: f32[16,1], index: 0, kind: input, shape index: {}]
  %s1 = inlined_call_operand.vmem [shape: bf16[16,32], index: 1, kind: input, shape index: {}]
  %s2 = inlined_call_operand.vmem [shape: bf16[16,32], index: 2, kind: input, shape index: {}]
  %s3 = inlined_call_operand.vmem [shape: bf16[32,96], index: 3, kind: input, shape index: {}]
  %s4 = inlined_call_operand.vmem [shape: bf16[32,96], index: 4, kind: input, shape index: {}]
  %s5 = inlined_call_operand.vmem [shape: f32[1,96], index: 5, kind: input, shape index: {}]
  %s6 = inlined_call_operand.vmem [shape: f32[1,32], index: 6, kind: input, shape index: {}]
  %s7 = inlined_call_operand.vmem [shape: bf16[64,16], index: 7, kind: input, shape index: {}]
  %s8 = inlined_call_operand.vmem [shape: f32[1,16], index: 8, kind: input, shape index: {}]
  %s9 = inlined_call_operand.vmem [shape: bf16[16,1], index: 9, kind: input, shape index: {}]
  %s10 = inlined_call_operand.vmem [shape: bf16[32,2], index: 10, kind: input, shape index: {}]
  %s11 = inlined_call_operand.vmem [shape: f32[1,2], index: 11, kind: input, shape index: {}]
  %s12 = inlined_call_operand.hbm [shape: f32[2,2], index: 12, kind: output, shape index: {}]
  %s13 = sld [smem:[#allocation0]]
  $region58: #{matching_accumulation.1} parent=0
    _
  %s15 = ssub.s32 1, %s13
  %s16 = scalar_select 0, %s15, %s13
  $region1: #{matching_accumulation.1} parent=0
    #allocation2 [shape = 'u8[1024]{0}', space=vmem, size = 0x400, scoped, tag = 'output window, operand 0, single buffered']
    #allocation3 [shape = 's32[1]{0}', space=sflag, size = 0x4, scoped, tag = 'scoped memory for matching_accumulation.1']
    %17 = vsyncpa [#allocation3], 0
    // Predicated region
    $region2: #{matching_accumulation.1} parent=1 // pred_check
      _
    $region3: #{matching_accumulation.1} parent=1 // pred_check_branch
      %19 = sbr.rel (0) target = $region5
    $region4: #{matching_accumulation.1} parent=1 // pred_region
      _
    $region5: #{matching_accumulation.1} parent=1 // pred_fallthru
      _
    // Predicated region
    $region6: #{matching_accumulation.1} parent=1 // pred_check
      _
    $region7: #{matching_accumulation.1} parent=1 // pred_check_branch
      %21 = sbr.rel (0) target = $region9
    $region8: #{matching_accumulation.1} parent=1 // pred_region
      _
    $region9: #{matching_accumulation.1} parent=1 // pred_fallthru
      _
    // Predicated region
    $region10: #{matching_accumulation.1} parent=1 // pred_check
      _
    $region11: #{matching_accumulation.1} parent=1 // pred_check_branch
      %23 = sbr.rel (0) target = $region13
    $region12: #{matching_accumulation.1} parent=1 // pred_region
      _
    $region13: #{matching_accumulation.1} parent=1 // pred_fallthru
      _
    // Predicated region
    $region14: #{matching_accumulation.1} parent=1 // pred_check
      _
    $region15: #{matching_accumulation.1} parent=1 // pred_check_branch
      %25 = sbr.rel (0) target = $region17
    $region16: #{matching_accumulation.1} parent=1 // pred_region
      _
    $region17: #{matching_accumulation.1} parent=1 // pred_fallthru
      _
    // Predicated region
    $region18: #{matching_accumulation.1} parent=1 // pred_check
      _
    $region19: #{matching_accumulation.1} parent=1 // pred_check_branch
      %27 = sbr.rel (0) target = $region21
    $region20: #{matching_accumulation.1} parent=1 // pred_region
      _
    $region21: #{matching_accumulation.1} parent=1 // pred_fallthru
      _
    // Predicated region
    $region22: #{matching_accumulation.1} parent=1 // pred_check
      _
    $region23: #{matching_accumulation.1} parent=1 // pred_check_branch
      %29 = sbr.rel (0) target = $region25
    $region24: #{matching_accumulation.1} parent=1 // pred_region
      _
    $region25: #{matching_accumulation.1} parent=1 // pred_fallthru
      _
    // Predicated region
    $region26: #{matching_accumulation.1} parent=1 // pred_check
      _
    $region27: #{matching_accumulation.1} parent=1 // pred_check_branch
      %31 = sbr.rel (0) target = $region29
    $region28: #{matching_accumulation.1} parent=1 // pred_region
      _
    $region29: #{matching_accumulation.1} parent=1 // pred_fallthru
      _
    // Predicated region
    $region30: #{matching_accumulation.1} parent=1 // pred_check
      _
    $region31: #{matching_accumulation.1} parent=1 // pred_check_branch
      %33 = sbr.rel (0) target = $region33
    $region32: #{matching_accumulation.1} parent=1 // pred_region
      _
    $region33: #{matching_accumulation.1} parent=1 // pred_fallthru
      _
    // Predicated region
    $region34: #{matching_accumulation.1} parent=1 // pred_check
      _
    $region35: #{matching_accumulation.1} parent=1 // pred_check_branch
      %35 = sbr.rel (0) target = $region37
    $region36: #{matching_accumulation.1} parent=1 // pred_region
      _
    $region37: #{matching_accumulation.1} parent=1 // pred_fallthru
      _
    // Predicated region
    $region38: #{matching_accumulation.1} parent=1 // pred_check
      _
    $region39: #{matching_accumulation.1} parent=1 // pred_check_branch
      %37 = sbr.rel (0) target = $region41
    $region40: #{matching_accumulation.1} parent=1 // pred_region
      _
    $region41: #{matching_accumulation.1} parent=1 // pred_fallthru
      _
    // Predicated region
    $region42: #{matching_accumulation.1} parent=1 // pred_check
      _
    $region43: #{matching_accumulation.1} parent=1 // pred_check_branch
      %39 = sbr.rel (0) target = $region45
    $region44: #{matching_accumulation.1} parent=1 // pred_region
      _
    $region45: #{matching_accumulation.1} parent=1 // pred_fallthru
      _
    // Predicated region
    $region46: #{matching_accumulation.1} parent=1 // pred_check
      _
    $region47: #{matching_accumulation.1} parent=1 // pred_check_branch
      %41 = sbr.rel (0) target = $region49
    $region48: #{matching_accumulation.1} parent=1 // pred_region
      _
    $region49: #{matching_accumulation.1} parent=1 // pred_fallthru
      _
    %v43 = vld [vmem:[%s1] sm:$0xf]
    %v44 = vld [vmem:[%s1 + $0x4] sm:$0xf]
    %v45 = vld [vmem:[%s3] sm:$0xf]
    %v46 = vld [vmem:[%s3 + $0x4] sm:$0xf]
    %v47 = vld [vmem:[%s3 + $0x8] sm:$0xf]
    %v48 = vld [vmem:[%s3 + $0xc] sm:$0xf]
    %v49 = vld [vmem:[%s5] sm:$0x1]
    %v51 = vperm.slane %v49, 0
    %v55 = vunpack.c.l.b16 %v43
    %v56 = vunpack.c.l.b16 %v44
    %v57 = vpack.c.b16 %v56, %v55
    %v62 = vunpack.c.l.b16 %v45
    %v63 = vunpack.c.l.b16 %v46
    %v64 = vunpack.c.l.b16 %v47
    %v65 = vunpack.c.l.b16 %v48
    %v66 = vpack.c.b16 %v63, %v62
    %v67 = vpack.c.b16 %v65, %v64
    %vm70 = vcmask 261120
    %v72 = vsel %vm70, %v57, 0
    %74 = vmatpush.bf16.msra.mxu0 0
    %75 = vmatpush.bf16.msra.mxu0 0
    %76 = vmatpush.bf16.msra.mxu0 0
    %77 = vmatpush.bf16.msra.mxu0 0
    %78 = vmatpush.bf16.msra.mxu0 0
    %79 = vmatpush.bf16.msra.mxu0 0
    %80 = vmatpush.bf16.msra.mxu0 %v67
    %81 = vmatpush.bf16.msra.mxu0 %v66
    %82 = vmatmul.bf16.gmra.mxu0 %v72
    %v83 = vpop.f32.mrf.mxu0
    %v84 = vadd.f32 %v51, %v83
    %v85 = vpop.f32.mrf.mxu0
    %v86 = vadd.f32 %v51, %v85
    %87 = vdwg.mxu0
    %v88 = vld [vmem:[%s4] sm:$0xf]
    %v89 = vld [vmem:[%s4 + $0x4] sm:$0xf]
    %v90 = vld [vmem:[%s4 + $0x8] sm:$0xf]
    %v91 = vld [vmem:[%s4 + $0xc] sm:$0xf]
    %v92 = vld [vmem:[%s6] sm:$0x1]
    %v93 = vld [vmem:[%s0] sm:$0xff]
    %v94 = vld [vmem:[%s0 + $0x8] sm:$0xff]
    %v99 = vunpack.c.l.b16 %v88
    %v100 = vunpack.c.l.b16 %v89
    %v101 = vunpack.c.l.b16 %v90
    %v102 = vunpack.c.l.b16 %v91
    %v103 = vpack.c.b16 %v100, %v99
    %v104 = vpack.c.b16 %v102, %v101
    %v108 = vsel %vm70, 0, 0
    %110 = vmatpush.bf16.msra.mxu0 0
    %111 = vmatpush.bf16.msra.mxu0 0
    %112 = vmatpush.bf16.msra.mxu0 0
    %113 = vmatpush.bf16.msra.mxu0 0
    %114 = vmatpush.bf16.msra.mxu0 0
    %115 = vmatpush.bf16.msra.mxu0 0
    %116 = vmatpush.bf16.msra.mxu0 %v104
    %117 = vmatpush.bf16.msra.mxu0 %v103
    %118 = vmatmul.bf16.gmra.mxu0 %v108
    %v119 = vpop.f32.mrf.mxu0
    %v120 = vadd.f32 0.0, %v119
    %v121 = vpop.f32.mrf.mxu0
    %122 = vdwg.mxu0
    %v123 = vadd.f32 %v84, %v120
    %v124 = vxor.u32 %v123, 2147483648
    %v125 = vmul.f32 %v124, 1.442695
    %v126 = vpow.pop %v125
    %v127 = vadd.f32 %v126, 1.0
    %v128 = vrcp.pop %v127
    %v129 = vmul.f32 %v127, %v128
    %v130 = vsub.f32 1.0, %v129
    %v131 = vmul.f32 %v128, %v130
    %v132 = vadd.f32 %v128, %v131
    %vm133 = vweird.f32 %v127
    %vm134 = vweird.f32 %v128
    %vm135 = vmor %vm133, %vm134
    %v136 = vsel %vm135, %v128, %v132
    %v137 = vand.u32 2147483647, %v127
    %vm138 = vcmp.eq.f32.partialorder %v137, 8.507059e+37
    %v139 = vand.u32 %v127, 2147483648
    %v140 = vor.u32 1.1754944e-38, %v139
    %v141 = vsel %vm138, %v140, %v136
    %v142 = vmul.f32 1.0, %v141
    %v144 = vperm.slane %v92, 0
    %145 = vrot.lane.b32.xlu0 %v144, 64
    %v146 = vpop.permute.xlu0 %145
    %v148 = vadd.f32 %v120, %v146
    %150 = vrot.lane.b32.xlu0 %v148, 64
    %v151 = vpop.permute.xlu0 %150
    %v153 = vmul.f32 %v142, %v151
    %155 = vrot.lane.b32.xlu0 %v153, 64
    %v156 = vpop.permute.xlu0 %155
    %v158 = vadd.f32 %v84, %v156
    %v159 = vtanh.pop %v158
    %v160 = vsub.f32 0.0, %v159
    %162 = vrot.lane.b32.xlu0 %v160, 96
    %v163 = vpop.permute.xlu0 %162
    %v165 = vmul.f32 %v142, %v163
    %167 = vrot.lane.b32.xlu0 %v165, 32
    %v168 = vpop.permute.xlu0 %167
    %v170 = vadd.f32 %v159, %v168
    %172 = vset.pattern.permute.xlu0 0
    %173 = vperm.xlu0 %172, %v93
    %v174 = vpop.permute.xlu0 %173
    %v176 = vmul.f32 %v170, %v174
    %v177 = vpack.c.bf16 %v170, %v170
    %179 = vrot.lane.b32.xlu0 %v177, 64
    %v180 = vpop.permute.xlu0 %179
    %v182 = vsel %vm70, %v180, 0
    %184 = vmatpush.bf16.msra.mxu0 0
    %185 = vmatpush.bf16.msra.mxu0 0
    %186 = vmatpush.bf16.msra.mxu0 0
    %187 = vmatpush.bf16.msra.mxu0 0
    %188 = vmatpush.bf16.msra.mxu0 0
    %189 = vmatpush.bf16.msra.mxu0 0
    %190 = vmatpush.bf16.msra.mxu0 %v104
    %191 = vmatpush.bf16.msra.mxu0 %v103
    %192 = vmatmul.bf16.gmra.mxu0 %v182
    %v193 = vpop.f32.mrf.mxu0
    %v194 = vadd.f32 0.0, %v193
    %v195 = vpop.f32.mrf.mxu0
    %196 = vdwg.mxu0
    %v198 = vrot.slane %v194, 6
    %v200 = vadd.f32 %v84, %v198
    %v201 = vxor.u32 %v200, 2147483648
    %v202 = vmul.f32 %v201, 1.442695
    %v203 = vpow.pop %v202
    %v204 = vadd.f32 %v203, 1.0
    %v205 = vrcp.pop %v204
    %v206 = vmul.f32 %v204, %v205
    %v207 = vsub.f32 1.0, %v206
    %v208 = vmul.f32 %v205, %v207
    %v209 = vadd.f32 %v205, %v208
    %vm210 = vweird.f32 %v204
    %vm211 = vweird.f32 %v205
    %vm212 = vmor %vm210, %vm211
    %v213 = vsel %vm212, %v205, %v209
    %v214 = vand.u32 2147483647, %v204
    %vm215 = vcmp.eq.f32.partialorder %v214, 8.507059e+37
    %v216 = vand.u32 %v204, 2147483648
    %v217 = vor.u32 1.1754944e-38, %v216
    %v218 = vsel %vm215, %v217, %v213
    %v219 = vmul.f32 1.0, %v218
    %v220 = vadd.f32 %v194, %v146
    %v222 = vrot.slane %v220, 6
    %223 = vrot.lane.b32.xlu0 %v222, 64
    %v224 = vpop.permute.xlu0 %223
    %v226 = vmul.f32 %v219, %v224
    %228 = vrot.lane.b32.xlu0 %v226, 64
    %v229 = vpop.permute.xlu0 %228
    %v231 = vadd.f32 %v84, %v229
    %v232 = vtanh.pop %v231
    %v234 = vrot.slane %v232, 2
    %v236 = vsub.f32 %v170, %v234
    %v238 = vrot.slane %v236, 6
    %239 = vrot.lane.b32.xlu0 %v238, 96
    %v240 = vpop.permute.xlu0 %239
    %v242 = vmul.f32 %v219, %v240
    %244 = vrot.lane.b32.xlu0 %v242, 32
    %v245 = vpop.permute.xlu0 %244
    %v247 = vadd.f32 %v232, %v245
    %v248 = vmul.f32 %v247, %v174
    %v249 = vpack.c.bf16 %v247, %v247
    %v251 = vrot.slane %v249, 1
    %252 = vrot.lane.b32.xlu0 %v251, 64
    %v253 = vpop.permute.xlu0 %252
    %v255 = vsel %vm70, %v253, 0
    %257 = vmatpush.bf16.msra.mxu0 0
    %258 = vmatpush.bf16.msra.mxu0 0
    %259 = vmatpush.bf16.msra.mxu0 0
    %260 = vmatpush.bf16.msra.mxu0 0
    %261 = vmatpush.bf16.msra.mxu0 0
    %262 = vmatpush.bf16.msra.mxu0 0
    %263 = vmatpush.bf16.msra.mxu0 %v104
    %264 = vmatpush.bf16.msra.mxu0 %v103
    %265 = vmatmul.bf16.gmra.mxu0 %v255
    %v266 = vpop.f32.mrf.mxu0
    %v267 = vadd.f32 0.0, %v266
    %v268 = vpop.f32.mrf.mxu0
    %269 = vdwg.mxu0
    %v271 = vrot.slane %v267, 4
    %v273 = vadd.f32 %v84, %v271
    %v274 = vxor.u32 %v273, 2147483648
    %v275 = vmul.f32 %v274, 1.442695
    %v276 = vpow.pop %v275
    %v277 = vadd.f32 %v276, 1.0
    %v278 = vrcp.pop %v277
    %v279 = vmul.f32 %v277, %v278
    %v280 = vsub.f32 1.0, %v279
    %v281 = vmul.f32 %v278, %v280
    %v282 = vadd.f32 %v278, %v281
    %vm283 = vweird.f32 %v277
    %vm284 = vweird.f32 %v278
    %vm285 = vmor %vm283, %vm284
    %v286 = vsel %vm285, %v278, %v282
    %v287 = vand.u32 2147483647, %v277
    %vm288 = vcmp.eq.f32.partialorder %v287, 8.507059e+37
    %v289 = vand.u32 %v277, 2147483648
    %v290 = vor.u32 1.1754944e-38, %v289
    %v291 = vsel %vm288, %v290, %v286
    %v292 = vmul.f32 1.0, %v291
    %v293 = vadd.f32 %v267, %v146
    %v295 = vrot.slane %v293, 4
    %296 = vrot.lane.b32.xlu0 %v295, 64
    %v297 = vpop.permute.xlu0 %296
    %v299 = vmul.f32 %v292, %v297
    %301 = vrot.lane.b32.xlu0 %v299, 64
    %v302 = vpop.permute.xlu0 %301
    %v304 = vadd.f32 %v84, %v302
    %v305 = vtanh.pop %v304
    %v307 = vrot.slane %v305, 2
    %v309 = vsub.f32 %v247, %v307
    %v311 = vrot.slane %v309, 6
    %312 = vrot.lane.b32.xlu0 %v311, 96
    %v313 = vpop.permute.xlu0 %312
    %v315 = vmul.f32 %v292, %v313
    %317 = vrot.lane.b32.xlu0 %v315, 32
    %v318 = vpop.permute.xlu0 %317
    %v320 = vadd.f32 %v305, %v318
    %v321 = vmul.f32 %v320, %v174
    %v322 = vpack.c.bf16 %v320, %v320
    %v324 = vrot.slane %v322, 2
    %325 = vrot.lane.b32.xlu0 %v324, 64
    %v326 = vpop.permute.xlu0 %325
    %v328 = vsel %vm70, %v326, 0
    %330 = vmatpush.bf16.msra.mxu0 0
    %331 = vmatpush.bf16.msra.mxu0 0
    %332 = vmatpush.bf16.msra.mxu0 0
    %333 = vmatpush.bf16.msra.mxu0 0
    %334 = vmatpush.bf16.msra.mxu0 0
    %335 = vmatpush.bf16.msra.mxu0 0
    %336 = vmatpush.bf16.msra.mxu0 %v104
    %337 = vmatpush.bf16.msra.mxu0 %v103
    %338 = vmatmul.bf16.gmra.mxu0 %v328
    %v339 = vpop.f32.mrf.mxu0
    %v340 = vadd.f32 0.0, %v339
    %v341 = vpop.f32.mrf.mxu0
    %342 = vdwg.mxu0
    %v344 = vrot.slane %v340, 2
    %v346 = vadd.f32 %v84, %v344
    %v347 = vxor.u32 %v346, 2147483648
    %v348 = vmul.f32 %v347, 1.442695
    %v349 = vpow.pop %v348
    %v350 = vadd.f32 %v349, 1.0
    %v351 = vrcp.pop %v350
    %v352 = vmul.f32 %v350, %v351
    %v353 = vsub.f32 1.0, %v352
    %v354 = vmul.f32 %v351, %v353
    %v355 = vadd.f32 %v351, %v354
    %vm356 = vweird.f32 %v350
    %vm357 = vweird.f32 %v351
    %vm358 = vmor %vm356, %vm357
    %v359 = vsel %vm358, %v351, %v355
    %v360 = vand.u32 2147483647, %v350
    %vm361 = vcmp.eq.f32.partialorder %v360, 8.507059e+37
    %v362 = vand.u32 %v350, 2147483648
    %v363 = vor.u32 1.1754944e-38, %v362
    %v364 = vsel %vm361, %v363, %v359
    %v365 = vmul.f32 1.0, %v364
    %v366 = vadd.f32 %v340, %v146
    %v368 = vrot.slane %v366, 2
    %369 = vrot.lane.b32.xlu0 %v368, 64
    %v370 = vpop.permute.xlu0 %369
    %v372 = vmul.f32 %v365, %v370
    %374 = vrot.lane.b32.xlu0 %v372, 64
    %v375 = vpop.permute.xlu0 %374
    %v377 = vadd.f32 %v84, %v375
    %v378 = vtanh.pop %v377
    %v380 = vrot.slane %v378, 2
    %v382 = vsub.f32 %v320, %v380
    %v384 = vrot.slane %v382, 6
    %385 = vrot.lane.b32.xlu0 %v384, 96
    %v386 = vpop.permute.xlu0 %385
    %v388 = vmul.f32 %v365, %v386
    %390 = vrot.lane.b32.xlu0 %v388, 32
    %v391 = vpop.permute.xlu0 %390
    %v393 = vadd.f32 %v378, %v391
    %v394 = vmul.f32 %v393, %v174
    %v395 = vpack.c.bf16 %v393, %v393
    %v397 = vrot.slane %v395, 3
    %398 = vrot.lane.b32.xlu0 %v397, 64
    %v399 = vpop.permute.xlu0 %398
    %v401 = vsel %vm70, %v399, 0
    %403 = vmatpush.bf16.msra.mxu0 0
    %404 = vmatpush.bf16.msra.mxu0 0
    %405 = vmatpush.bf16.msra.mxu0 0
    %406 = vmatpush.bf16.msra.mxu0 0
    %407 = vmatpush.bf16.msra.mxu0 0
    %408 = vmatpush.bf16.msra.mxu0 0
    %409 = vmatpush.bf16.msra.mxu0 %v104
    %410 = vmatpush.bf16.msra.mxu0 %v103
    %411 = vmatmul.bf16.gmra.mxu0 %v401
    %v412 = vpop.f32.mrf.mxu0
    %v413 = vadd.f32 0.0, %v412
    %v414 = vpop.f32.mrf.mxu0
    %415 = vdwg.mxu0
    %v416 = vadd.f32 %v86, %v413
    %v417 = vxor.u32 %v416, 2147483648
    %v418 = vmul.f32 %v417, 1.442695
    %v419 = vpow.pop %v418
    %v420 = vadd.f32 %v419, 1.0
    %v421 = vrcp.pop %v420
    %v422 = vmul.f32 %v420, %v421
    %v423 = vsub.f32 1.0, %v422
    %v424 = vmul.f32 %v421, %v423
    %v425 = vadd.f32 %v421, %v424
    %vm426 = vweird.f32 %v420
    %vm427 = vweird.f32 %v421
    %vm428 = vmor %vm426, %vm427
    %v429 = vsel %vm428, %v421, %v425
    %v430 = vand.u32 2147483647, %v420
    %vm431 = vcmp.eq.f32.partialorder %v430, 8.507059e+37
    %v432 = vand.u32 %v420, 2147483648
    %v433 = vor.u32 1.1754944e-38, %v432
    %v434 = vsel %vm431, %v433, %v429
    %v435 = vmul.f32 1.0, %v434
    %v436 = vadd.f32 %v413, %v146
    %438 = vrot.lane.b32.xlu0 %v436, 64
    %v439 = vpop.permute.xlu0 %438
    %v441 = vmul.f32 %v435, %v439
    %443 = vrot.lane.b32.xlu0 %v441, 64
    %v444 = vpop.permute.xlu0 %443
    %v446 = vadd.f32 %v86, %v444
    %v447 = vtanh.pop %v446
    %v449 = vrot.slane %v447, 2
    %v451 = vsub.f32 %v393, %v449
    %v453 = vrot.slane %v451, 6
    %454 = vrot.lane.b32.xlu0 %v453, 96
    %v455 = vpop.permute.xlu0 %454
    %v457 = vmul.f32 %v435, %v455
    %459 = vrot.lane.b32.xlu0 %v457, 32
    %v460 = vpop.permute.xlu0 %459
    %v462 = vadd.f32 %v447, %v460
    %464 = vset.pattern.permute.xlu0 0
    %465 = vperm.xlu0 %464, %v94
    %v466 = vpop.permute.xlu0 %465
    %v468 = vmul.f32 %v462, %v466
    %v469 = vpack.c.bf16 %v462, %v462
    %471 = vrot.lane.b32.xlu0 %v469, 64
    %v472 = vpop.permute.xlu0 %471
    %v474 = vsel %vm70, %v472, 0
    %476 = vmatpush.bf16.msra.mxu0 0
    %477 = vmatpush.bf16.msra.mxu0 0
    %478 = vmatpush.bf16.msra.mxu0 0
    %479 = vmatpush.bf16.msra.mxu0 0
    %480 = vmatpush.bf16.msra.mxu0 0
    %481 = vmatpush.bf16.msra.mxu0 0
    %482 = vmatpush.bf16.msra.mxu0 %v104
    %483 = vmatpush.bf16.msra.mxu0 %v103
    %484 = vmatmul.bf16.gmra.mxu0 %v474
    %v485 = vpop.f32.mrf.mxu0
    %v486 = vadd.f32 0.0, %v485
    %v487 = vpop.f32.mrf.mxu0
    %488 = vdwg.mxu0
    %v490 = vrot.slane %v486, 6
    %v492 = vadd.f32 %v86, %v490
    %v493 = vxor.u32 %v492, 2147483648
    %v494 = vmul.f32 %v493, 1.442695
    %v495 = vpow.pop %v494
    %v496 = vadd.f32 %v495, 1.0
    %v497 = vrcp.pop %v496
    %v498 = vmul.f32 %v496, %v497
    %v499 = vsub.f32 1.0, %v498
    %v500 = vmul.f32 %v497, %v499
    %v501 = vadd.f32 %v497, %v500
    %vm502 = vweird.f32 %v496
    %vm503 = vweird.f32 %v497
    %vm504 = vmor %vm502, %vm503
    %v505 = vsel %vm504, %v497, %v501
    %v506 = vand.u32 2147483647, %v496
    %vm507 = vcmp.eq.f32.partialorder %v506, 8.507059e+37
    %v508 = vand.u32 %v496, 2147483648
    %v509 = vor.u32 1.1754944e-38, %v508
    %v510 = vsel %vm507, %v509, %v505
    %v511 = vmul.f32 1.0, %v510
    %v512 = vadd.f32 %v486, %v146
    %v514 = vrot.slane %v512, 6
    %515 = vrot.lane.b32.xlu0 %v514, 64
    %v516 = vpop.permute.xlu0 %515
    %v518 = vmul.f32 %v511, %v516
    %520 = vrot.lane.b32.xlu0 %v518, 64
    %v521 = vpop.permute.xlu0 %520
    %v523 = vadd.f32 %v86, %v521
    %v524 = vtanh.pop %v523
    %v526 = vrot.slane %v524, 2
    %v528 = vsub.f32 %v462, %v526
    %v530 = vrot.slane %v528, 6
    %531 = vrot.lane.b32.xlu0 %v530, 96
    %v532 = vpop.permute.xlu0 %531
    %v534 = vmul.f32 %v511, %v532
    %536 = vrot.lane.b32.xlu0 %v534, 32
    %v537 = vpop.permute.xlu0 %536
    %v539 = vadd.f32 %v524, %v537
    %v540 = vmul.f32 %v539, %v466
    %v541 = vpack.c.bf16 %v539, %v539
    %v543 = vrot.slane %v541, 1
    %544 = vrot.lane.b32.xlu0 %v543, 64
    %v545 = vpop.permute.xlu0 %544
    %v547 = vsel %vm70, %v545, 0
    %549 = vmatpush.bf16.msra.mxu0 0
    %550 = vmatpush.bf16.msra.mxu0 0
    %551 = vmatpush.bf16.msra.mxu0 0
    %552 = vmatpush.bf16.msra.mxu0 0
    %553 = vmatpush.bf16.msra.mxu0 0
    %554 = vmatpush.bf16.msra.mxu0 0
    %555 = vmatpush.bf16.msra.mxu0 %v104
    %556 = vmatpush.bf16.msra.mxu0 %v103
    %557 = vmatmul.bf16.gmra.mxu0 %v547
    %v558 = vpop.f32.mrf.mxu0
    %v559 = vadd.f32 0.0, %v558
    %v560 = vpop.f32.mrf.mxu0
    %561 = vdwg.mxu0
    %v563 = vrot.slane %v559, 4
    %v565 = vadd.f32 %v86, %v563
    %v566 = vxor.u32 %v565, 2147483648
    %v567 = vmul.f32 %v566, 1.442695
    %v568 = vpow.pop %v567
    %v569 = vadd.f32 %v568, 1.0
    %v570 = vrcp.pop %v569
    %v571 = vmul.f32 %v569, %v570
    %v572 = vsub.f32 1.0, %v571
    %v573 = vmul.f32 %v570, %v572
    %v574 = vadd.f32 %v570, %v573
    %vm575 = vweird.f32 %v569
    %vm576 = vweird.f32 %v570
    %vm577 = vmor %vm575, %vm576
    %v578 = vsel %vm577, %v570, %v574
    %v579 = vand.u32 2147483647, %v569
    %vm580 = vcmp.eq.f32.partialorder %v579, 8.507059e+37
    %v581 = vand.u32 %v569, 2147483648
    %v582 = vor.u32 1.1754944e-38, %v581
    %v583 = vsel %vm580, %v582, %v578
    %v584 = vmul.f32 1.0, %v583
    %v585 = vadd.f32 %v559, %v146
    %v587 = vrot.slane %v585, 4
    %588 = vrot.lane.b32.xlu0 %v587, 64
    %v589 = vpop.permute.xlu0 %588
    %v591 = vmul.f32 %v584, %v589
    %593 = vrot.lane.b32.xlu0 %v591, 64
    %v594 = vpop.permute.xlu0 %593
    %v596 = vadd.f32 %v86, %v594
    %v597 = vtanh.pop %v596
    %v599 = vrot.slane %v597, 2
    %v601 = vsub.f32 %v539, %v599
    %v603 = vrot.slane %v601, 6
    %604 = vrot.lane.b32.xlu0 %v603, 96
    %v605 = vpop.permute.xlu0 %604
    %v607 = vmul.f32 %v584, %v605
    %609 = vrot.lane.b32.xlu0 %v607, 32
    %v610 = vpop.permute.xlu0 %609
    %v612 = vadd.f32 %v597, %v610
    %v613 = vmul.f32 %v612, %v466
    %v614 = vpack.c.bf16 %v612, %v612
    %v616 = vrot.slane %v614, 2
    %617 = vrot.lane.b32.xlu0 %v616, 64
    %v618 = vpop.permute.xlu0 %617
    %v620 = vsel %vm70, %v618, 0
    %622 = vmatpush.bf16.msra.mxu0 0
    %623 = vmatpush.bf16.msra.mxu0 0
    %624 = vmatpush.bf16.msra.mxu0 0
    %625 = vmatpush.bf16.msra.mxu0 0
    %626 = vmatpush.bf16.msra.mxu0 0
    %627 = vmatpush.bf16.msra.mxu0 0
    %628 = vmatpush.bf16.msra.mxu0 %v104
    %629 = vmatpush.bf16.msra.mxu0 %v103
    %630 = vmatmul.bf16.gmra.mxu0 %v620
    %v631 = vpop.f32.mrf.mxu0
    %v632 = vadd.f32 0.0, %v631
    %v633 = vpop.f32.mrf.mxu0
    %634 = vdwg.mxu0
    %v636 = vrot.slane %v632, 2
    %v638 = vadd.f32 %v86, %v636
    %v639 = vxor.u32 %v638, 2147483648
    %v640 = vmul.f32 %v639, 1.442695
    %v641 = vpow.pop %v640
    %v642 = vadd.f32 %v641, 1.0
    %v643 = vrcp.pop %v642
    %v644 = vmul.f32 %v642, %v643
    %v645 = vsub.f32 1.0, %v644
    %v646 = vmul.f32 %v643, %v645
    %v647 = vadd.f32 %v643, %v646
    %vm648 = vweird.f32 %v642
    %vm649 = vweird.f32 %v643
    %vm650 = vmor %vm648, %vm649
    %v651 = vsel %vm650, %v643, %v647
    %v652 = vand.u32 2147483647, %v642
    %vm653 = vcmp.eq.f32.partialorder %v652, 8.507059e+37
    %v654 = vand.u32 %v642, 2147483648
    %v655 = vor.u32 1.1754944e-38, %v654
    %v656 = vsel %vm653, %v655, %v651
    %v657 = vmul.f32 1.0, %v656
    %v658 = vadd.f32 %v632, %v146
    %v660 = vrot.slane %v658, 2
    %661 = vrot.lane.b32.xlu0 %v660, 64
    %v662 = vpop.permute.xlu0 %661
    %v664 = vmul.f32 %v657, %v662
    %666 = vrot.lane.b32.xlu0 %v664, 64
    %v667 = vpop.permute.xlu0 %666
    %v669 = vadd.f32 %v86, %v667
    %v670 = vtanh.pop %v669
    %v672 = vrot.slane %v670, 2
    %v674 = vsub.f32 %v612, %v672
    %v676 = vrot.slane %v674, 6
    %677 = vrot.lane.b32.xlu0 %v676, 96
    %v678 = vpop.permute.xlu0 %677
    %v680 = vmul.f32 %v657, %v678
    %682 = vrot.lane.b32.xlu0 %v680, 32
    %v683 = vpop.permute.xlu0 %682
    %v685 = vadd.f32 %v670, %v683
    %v686 = vmul.f32 %v685, %v466
    %vm687 = vcmask 1041408
    %v688 = vsel %vm687, %v176, %v248
    %vm689 = vcmask 1043456
    %v690 = vsel %vm689, %v688, %v321
    %vm691 = vcmask 1045504
    %v692 = vsel %vm691, %v690, %v394
    %v693 = vsel %vm687, %v468, %v540
    %v694 = vsel %vm689, %v693, %v613
    %v695 = vsel %vm691, %v694, %v686
    %v696 = vld [vmem:[%s2] sm:$0xf]
    %v697 = vld [vmem:[%s2 + $0x4] sm:$0xf]
    %v698 = vpack.c.bf16 %v692, %v692
    %v699 = vpack.c.bf16 %v695, %v695
    %v702 = vunpack.c.l.b16 %v696
    %v703 = vunpack.c.l.b16 %v697
    %v704 = vpack.c.b16 %v703, %v702
    %v707 = vunpack.c.l.b16 %v698
    %v708 = vunpack.c.l.b16 %v699
    %v709 = vpack.c.b16 %v708, %v707
    %710 = vrot.lane.b32.xlu0 %v709, 96
    %v711 = vpop.permute.xlu0 %710
    %v714 = vsel %vm70, %v704, %v711
    %v715 = vld [vmem:[%s7] sm:$0xf]
    %v716 = vld [vmem:[%s7 + $0x4] sm:$0xf]
    %v717 = vld [vmem:[%s7 + $0x8] sm:$0xf]
    %v718 = vld [vmem:[%s7 + $0xc] sm:$0xf]
    %v719 = vld [vmem:[%s7 + $0x10] sm:$0xf]
    %v720 = vld [vmem:[%s7 + $0x14] sm:$0xf]
    %v721 = vld [vmem:[%s7 + $0x18] sm:$0xf]
    %v722 = vld [vmem:[%s7 + $0x1c] sm:$0xf]
    %v723 = vld [vmem:[%s8] sm:$0x1]
    %v725 = vperm.slane %v723, 0
    %v735 = vunpack.c.l.b16 %v715
    %v736 = vunpack.c.l.b16 %v716
    %v737 = vunpack.c.l.b16 %v717
    %v738 = vunpack.c.l.b16 %v718
    %v739 = vunpack.c.l.b16 %v719
    %v740 = vunpack.c.l.b16 %v720
    %v741 = vunpack.c.l.b16 %v721
    %v742 = vunpack.c.l.b16 %v722
    %v743 = vpack.c.b16 %v736, %v735
    %v744 = vpack.c.b16 %v738, %v737
    %v745 = vpack.c.b16 %v740, %v739
    %v746 = vpack.c.b16 %v742, %v741
    %vm751 = vcmask 523264
    %v752 = vsel %vm751, %v714, 0
    %754 = vmatpush.bf16.msra.mxu0 0
    %755 = vmatpush.bf16.msra.mxu0 0
    %756 = vmatpush.bf16.msra.mxu0 0
    %757 = vmatpush.bf16.msra.mxu0 0
    %758 = vmatpush.bf16.msra.mxu0 %v746
    %759 = vmatpush.bf16.msra.mxu0 %v745
    %760 = vmatpush.bf16.msra.mxu0 %v744
    %761 = vmatpush.bf16.msra.mxu0 %v743
    %762 = vmatmul.bf16.gmra.mxu0 %v752
    %v763 = vpop.f32.mrf.mxu0
    %v764 = vadd.f32 %v725, %v763
    %v765 = vpop.f32.mrf.mxu0
    %v766 = vadd.f32 %v725, %v765
    %767 = vdwg.mxu0
    %v768 = vtanh.pop %v764
    %v769 = vtanh.pop %v766
    %v770 = vpack.c.bf16 %v769, %v768
    %v771 = vld [vmem:[%s9] sm:$0xf]
    %v772 = vld [vmem:[%s9 + $0x4] sm:$0xf]
    %v775 = vunpack.c.l.b16 %v771
    %v776 = vunpack.c.l.b16 %v772
    %v777 = vpack.c.b16 %v776, %v775
    %vm779 = vcmask 130048
    %v781 = vsel %vm779, %v770, 0
    %783 = vmatpush.bf16.msra.mxu0 0
    %784 = vmatpush.bf16.msra.mxu0 0
    %785 = vmatpush.bf16.msra.mxu0 0
    %786 = vmatpush.bf16.msra.mxu0 0
    %787 = vmatpush.bf16.msra.mxu0 0
    %788 = vmatpush.bf16.msra.mxu0 0
    %789 = vmatpush.bf16.msra.mxu0 0
    %790 = vmatpush.bf16.msra.mxu0 %v777
    %791 = vmatmul.bf16.gmra.mxu0 %v781
    %v792 = vpop.f32.mrf.mxu0
    %v793 = vadd.f32 0.0, %v792
    %v794 = vpop.f32.mrf.mxu0
    %v795 = vadd.f32 0.0, %v794
    %796 = vdwg.mxu0
    %v798 = vrot.slane %v793, 2
    %799 = vrot.lane.b32.xlu0 %v798, 1
    %v800 = vpop.permute.xlu0 %799
    %v802 = vrot.slane %v793, 4
    %803 = vrot.lane.b32.xlu0 %v802, 2
    %v804 = vpop.permute.xlu0 %803
    %v806 = vrot.slane %v793, 6
    %807 = vrot.lane.b32.xlu0 %v806, 3
    %v808 = vpop.permute.xlu0 %807
    %811 = vrot.lane.b32.xlu0 %v795, 4
    %v812 = vpop.permute.xlu0 %811
    %v814 = vrot.slane %v795, 2
    %815 = vrot.lane.b32.xlu0 %v814, 5
    %v816 = vpop.permute.xlu0 %815
    %v818 = vrot.slane %v795, 4
    %819 = vrot.lane.b32.xlu0 %v818, 6
    %v820 = vpop.permute.xlu0 %819
    %v822 = vrot.slane %v795, 6
    %823 = vrot.lane.b32.xlu0 %v822, 7
    %v824 = vpop.permute.xlu0 %823
    %vm826 = vcmask 7168
    %v827 = vsel %vm826, %v793, %v800
    %vm828 = vcmask 15360
    %v829 = vsel %vm828, %v827, %v804
    %vm830 = vcmask 23552
    %v831 = vsel %vm830, %v829, %v808
    %vm832 = vcmask 31744
    %v833 = vsel %vm832, %v831, %v812
    %vm834 = vcmask 39936
    %v835 = vsel %vm834, %v833, %v816
    %vm836 = vcmask 48128
    %v837 = vsel %vm836, %v835, %v820
    %vm838 = vcmask 56320
    %v839 = vsel %vm838, %v837, %v824
    %vm840 = vcmask 58368
    %v841 = vsel %vm840, %v839, -inf
    %842 = vmax.xlane.f32.xlu0 %v841
    %v843 = vpop.xlane.xlu0 %842
    %v844 = vsub.f32 %v839, %v843
    %v845 = vmul.f32 %v844, 1.442695
    %v846 = vpow.pop %v845
    %v847 = vsel %vm840, %v846, 0.0
    %848 = vadd.xlane.f32.xlu0 %v847
    %v849 = vpop.xlane.xlu0 %848
    %v850 = vrcp.pop %v849
    %v851 = vmul.f32 %v846, %v850
    %853 = vset.pattern.permute.xlu0 0
    %854 = vperm.xlu0 %853, %v851
    %v855 = vpop.permute.xlu0 %854
    %v857 = vmul.f32 %v855, %v176
    %v858 = vadd.f32 %v857, 0.0
    %859 = vset.pattern.permute.xlu0 1
    %860 = vperm.xlu0 %859, %v851
    %v861 = vpop.permute.xlu0 %860
    %v864 = vrot.slane %v248, 2
    %865 = vrot.lane.b32.xlu0 %v864, 64
    %v866 = vpop.permute.xlu0 %865
    %v868 = vmul.f32 %v861, %v866
    %870 = vrot.lane.b32.xlu0 %v868, 64
    %v871 = vpop.permute.xlu0 %870
    %v873 = vadd.f32 %v858, %v871
    %874 = vset.pattern.permute.xlu0 2
    %875 = vperm.xlu0 %874, %v851
    %v876 = vpop.permute.xlu0 %875
    %v879 = vrot.slane %v321, 4
    %880 = vrot.lane.b32.xlu0 %v879, 64
    %v881 = vpop.permute.xlu0 %880
    %v883 = vmul.f32 %v876, %v881
    %885 = vrot.lane.b32.xlu0 %v883, 64
    %v886 = vpop.permute.xlu0 %885
    %v888 = vadd.f32 %v873, %v886
    %889 = vset.pattern.permute.xlu0 3
    %890 = vperm.xlu0 %889, %v851
    %v891 = vpop.permute.xlu0 %890
    %v894 = vrot.slane %v394, 6
    %895 = vrot.lane.b32.xlu0 %v894, 64
    %v896 = vpop.permute.xlu0 %895
    %v898 = vmul.f32 %v891, %v896
    %900 = vrot.lane.b32.xlu0 %v898, 64
    %v901 = vpop.permute.xlu0 %900
    %v903 = vadd.f32 %v888, %v901
    %904 = vset.pattern.permute.xlu0 4
    %905 = vperm.xlu0 %904, %v851
    %v906 = vpop.permute.xlu0 %905
    %v908 = vmul.f32 %v906, %v468
    %v909 = vadd.f32 %v903, %v908
    %910 = vset.pattern.permute.xlu0 5
    %911 = vperm.xlu0 %910, %v851
    %v912 = vpop.permute.xlu0 %911
    %v915 = vrot.slane %v540, 2
    %916 = vrot.lane.b32.xlu0 %v915, 64
    %v917 = vpop.permute.xlu0 %916
    %v919 = vmul.f32 %v912, %v917
    %921 = vrot.lane.b32.xlu0 %v919, 64
    %v922 = vpop.permute.xlu0 %921
    %v924 = vadd.f32 %v909, %v922
    %925 = vset.pattern.permute.xlu0 6
    %926 = vperm.xlu0 %925, %v851
    %v927 = vpop.permute.xlu0 %926
    %v930 = vrot.slane %v613, 4
    %931 = vrot.lane.b32.xlu0 %v930, 64
    %v932 = vpop.permute.xlu0 %931
    %v934 = vmul.f32 %v927, %v932
    %936 = vrot.lane.b32.xlu0 %v934, 64
    %v937 = vpop.permute.xlu0 %936
    %v939 = vadd.f32 %v924, %v937
    %940 = vset.pattern.permute.xlu0 7
    %941 = vperm.xlu0 %940, %v851
    %v942 = vpop.permute.xlu0 %941
    %v945 = vrot.slane %v686, 6
    %946 = vrot.lane.b32.xlu0 %v945, 64
    %v947 = vpop.permute.xlu0 %946
    %v949 = vmul.f32 %v942, %v947
    %951 = vrot.lane.b32.xlu0 %v949, 64
    %v952 = vpop.permute.xlu0 %951
    %v954 = vadd.f32 %v939, %v952
    %v955 = vpack.c.bf16 %v954, %v954
    %v956 = vld [vmem:[%s10] sm:$0xf]
    %v957 = vld [vmem:[%s10 + $0x4] sm:$0xf]
    %v958 = vld [vmem:[%s10 + $0x8] sm:$0xf]
    %v959 = vld [vmem:[%s10 + $0xc] sm:$0xf]
    %v960 = vld [vmem:[%s11] sm:$0x1]
    %v962 = vperm.slane %v960, 0
    %965 = vrot.lane.b32.xlu0 %v955, 64
    %v966 = vpop.permute.xlu0 %965
    %v971 = vunpack.c.l.b16 %v956
    %v972 = vunpack.c.l.b16 %v957
    %v973 = vunpack.c.l.b16 %v958
    %v974 = vunpack.c.l.b16 %v959
    %v975 = vpack.c.b16 %v972, %v971
    %v976 = vpack.c.b16 %v974, %v973
    %v980 = vsel %vm70, %v966, 0
    %982 = vmatpush.bf16.msra.mxu0 0
    %983 = vmatpush.bf16.msra.mxu0 0
    %984 = vmatpush.bf16.msra.mxu0 0
    %985 = vmatpush.bf16.msra.mxu0 0
    %986 = vmatpush.bf16.msra.mxu0 0
    %987 = vmatpush.bf16.msra.mxu0 0
    %988 = vmatpush.bf16.msra.mxu0 %v976
    %989 = vmatpush.bf16.msra.mxu0 %v975
    %990 = vmatmul.bf16.gmra.mxu0 %v980
    %v991 = vpop.f32.mrf.mxu0
    %v992 = vadd.f32 %v962, %v991
    %v993 = vpop.f32.mrf.mxu0
    %994 = vdwg.mxu0
    %vm995 = vcmask 9216
    %996 = vst.msk [vmem:[#allocation2] sm:$0x3] %vm995, %v992
    // Predicated region
    $region50: #{matching_accumulation.1} parent=1 // pred_check
      _
    $region51: #{matching_accumulation.1} parent=1 // pred_check_branch
      %998 = sbr.rel (0) target = $region53
    $region52: #{matching_accumulation.1} parent=1 // pred_region
      %1000 = vsyncadd [#allocation3], 0
      %s1002 = sshll.u32 [#allocation2], 4
      %s1003 = int_to_ptr.vmem [resolvable:$true] %s1002
      %s1004 = sshll.u32 %s12, 4
      %s1005 = int_to_ptr.hbm [resolvable:$true] %s1004
      %1007 = dma.vmem_to_hbm [thread:$0]  %s1003, 32, %s1005, [#allocation3]
    $region53: #{matching_accumulation.1} parent=1 // pred_fallthru
      _
    // Predicated region
    $region54: #{matching_accumulation.1} parent=1 // pred_check
      _
    $region55: #{matching_accumulation.1} parent=1 // pred_check_branch
      %1009 = sbr.rel (0) target = $region57
    $region56: #{matching_accumulation.1} parent=1 // pred_region
      %1011 = dma.done [#allocation3], 32
    $region57: #{matching_accumulation.1} parent=1 // pred_fallthru
      _
    %1012 = vsyncpa [#allocation3], 1

</llo_original>
